<compile_context>
chip_gen: v5e
topology: v5e:2x2
jax: 0.10.0
libtpu: 0.0.40
codegen_flags: <defaults>
</compile_context>

<pallas_src>
import numpy as np
import jax
import jax.numpy as jnp
from jax.experimental import pallas as pl
from jax.experimental.pallas import tpu as pltpu

EPS = 1e-5  # torch.nn.LayerNorm default eps


def _round_up(x, m):
    return ((x + m - 1) // m) * m


def _cdiv(a, b):
    return (a + b - 1) // b


def _make_mumlp_kernel(hidden_sizes, action_size, output_max, compute_dtype):
    """Builds a fused kernel for a fixed layer structure (shapes are static)."""
    n_hidden = len(hidden_sizes)

    def kernel(obs_ref, vec_ref, *refs):
        # refs = (w_0, ..., w_{n_hidden-1}, w_last, out_ref)
        w_refs = refs[:n_hidden + 1]
        out_ref = refs[n_hidden + 1]

        h = obs_ref[...]                                    # (BM, D_in) compute_dtype
        for li, hsz in enumerate(hidden_sizes):
            w = w_refs[li][...]                             # (K, hsz) compute_dtype
            b = vec_ref[3 * li + 0:3 * li + 1, :hsz]        # (1, hsz) f32
            g = vec_ref[3 * li + 1:3 * li + 2, :hsz]
            be = vec_ref[3 * li + 2:3 * li + 3, :hsz]
            # MXU matmul with f32 accumulation.
            z = jnp.dot(h, w, preferred_element_type=jnp.float32) + b
            # One-pass LayerNorm: var = E[x^2] - mu^2, gamma folded into scale.
            mu = jnp.mean(z, axis=-1, keepdims=True)
            var = jnp.mean(z * z, axis=-1, keepdims=True) - mu * mu
            zn = (z - mu) * (jax.lax.rsqrt(var + EPS) * g) + be
            h = jnp.maximum(zn, 0.0).astype(compute_dtype)  # back to stream dtype

        wl = w_refs[n_hidden][...]                          # (H_last, A)
        bl = vec_ref[3 * n_hidden:3 * n_hidden + 1, :action_size]
        out = jnp.dot(h, wl, preferred_element_type=jnp.float32) + bl
        out_ref[...] = (output_max * jnp.tanh(out)).astype(out_ref.dtype)

    return kernel


def mumlp_forward(params, observation, prev_action=None, prev_reward=None, *,
                  output_max=1.0, obs_ndim=1, compute_dtype=jnp.bfloat16,
                  max_block_m=4096, vmem_budget_bytes=40 * (1 << 20),
                  vmem_limit_bytes=56 * (1 << 20)):
    """observation (..., obs_shape) -> mu (..., action_size)."""
    del prev_action, prev_reward  # unused by the PyTorch forward

    lead_shape = observation.shape[:observation.ndim - obs_ndim]
    D_in = int(np.prod(observation.shape[observation.ndim - obs_ndim:]))
    obs2d = observation.reshape(-1, D_in).astype(compute_dtype)
    TB = obs2d.shape[0]

    hidden_sizes = tuple(int(l["w"].shape[1]) for l in params["layers"])
    action_size = int(params["last"]["w"].shape[1])
    n_hidden = len(hidden_sizes)
    Hmax = max(max(hidden_sizes), action_size)
    in_itemsize = jnp.dtype(compute_dtype).itemsize

    # ---- pack all small per-layer vectors into one (R, Hmax) f32 table ------
    rows = []
    for l in params["layers"]:
        for v in (l["b"], l["g"], l["beta"]):
            v = jnp.asarray(v, jnp.float32).reshape(1, -1)
            rows.append(jnp.pad(v, ((0, 0), (0, Hmax - v.shape[1]))))
    bl = jnp.asarray(params["last"]["b"], jnp.float32).reshape(1, -1)
    rows.append(jnp.pad(bl, ((0, 0), (0, Hmax - bl.shape[1]))))
    n_rows = len(rows)                       # 3*n_hidden + 1
    R = _round_up(n_rows, 8)
    if R > n_rows:
        rows.append(jnp.zeros((R - n_rows, Hmax), jnp.float32))
    vec = jnp.concatenate(rows, axis=0)      # (R, Hmax) f32

    # ---- weights streamed once in compute_dtype (bf16 halves HBM traffic) ---
    weights = [jnp.asarray(l["w"], compute_dtype) for l in params["layers"]]
    weights.append(jnp.asarray(params["last"]["w"], compute_dtype))
    w_bytes = sum(int(np.prod(w.shape)) for w in weights) * in_itemsize
    vec_bytes = R * Hmax * 4

    # ---- VMEM-aware batch tile: big, balanced, multiple of 16 ---------------
    fixed_bytes = 2 * (w_bytes + vec_bytes) + (2 << 20)   # x2: dbl-buffer fallback + headroom
    per_row_bytes = (2 * D_in * in_itemsize               # obs tile, double-buffered
                     + 2 * action_size * 4                # out tile, double-buffered
                     + 6 * Hmax * 4                       # live f32 activations / LN temps
                     + 2 * Hmax * in_itemsize)            # low-precision copy of h
    bm_cap = (vmem_budget_bytes - fixed_bytes) // per_row_bytes
    bm_cap = int(max(16, min(max_block_m, (bm_cap // 16) * 16)))
    num_steps = max(1, _cdiv(TB, bm_cap))
    BM = _round_up(_cdiv(TB, num_steps), 16)              # balanced tiles, bf16-safe sublanes
    TB_pad = num_steps * BM
    if TB_pad != TB:
        obs2d = jnp.pad(obs2d, ((0, TB_pad - TB), (0, 0)))
    grid = (num_steps,)

    # ---- cost estimate: helps XLA overlap the custom call -------------------
    mm_flops = 2 * TB_pad * sum(int(np.prod(w.shape)) for w in weights)
    ln_flops = 8 * TB_pad * sum(hidden_sizes)
    ce = pl.CostEstimate(
        flops=int(mm_flops + ln_flops),
        transcendentals=int(TB_pad * (action_size + n_hidden)),
        bytes_accessed=int(TB_pad * D_in * in_itemsize + w_bytes + vec_bytes
                           + TB_pad * action_size * 4),
    )

    kernel = _make_mumlp_kernel(hidden_sizes, action_size, float(output_max),
                                compute_dtype)

    def _run(dim_sem, single_buffer_invariants):
        def invariant_spec(shape):
            if single_buffer_invariants:
                # Grid-invariant -> a single VMEM buffer is enough.
                return pl.BlockSpec(shape, lambda i: (0, 0),
                                    pipeline_mode=pl.Buffered(1))
            return pl.BlockSpec(shape, lambda i: (0, 0))

        in_specs = [pl.BlockSpec((BM, D_in), lambda i: (i, 0)),   # streamed obs tile
                    invariant_spec((R, Hmax))]                    # packed b/gamma/beta
        in_specs += [invariant_spec(tuple(w.shape)) for w in weights]
        out_spec = pl.BlockSpec((BM, action_size), lambda i: (i, 0))

        call = pl.pallas_call(
            kernel,
            out_shape=jax.ShapeDtypeStruct((TB_pad, action_size), jnp.float32),
            grid_spec=pltpu.PrefetchScalarGridSpec(
                num_scalar_prefetch=0,
                grid=grid,
                in_specs=in_specs,
                out_specs=out_spec,
            ),
            compiler_params=pltpu.CompilerParams(
                dimension_semantics=dim_sem,
                vmem_limit_bytes=int(vmem_limit_bytes)),
            cost_estimate=ce,
        )
        return call(obs2d, vec, *weights)

    # Preferred configuration first; fall back gracefully so the kernel always
    # compiles regardless of chip generation / jax build.
    sem_candidates = []
    if num_steps >= 2:
        sem_candidates.append((pltpu.CORE_PARALLEL,))   # v7x: shard batch over both TCs
    sem_candidates.append(("parallel",))

    attempts = [(s, sb) for sb in (True, False) for s in sem_candidates]
    out = None
    last_err = None
    for dim_sem, single_buf in attempts:
        try:
            out = _run(dim_sem, single_buf)
            break
        except Exception as e:  # noqa: BLE001 - fall back to a safer config
            last_err = e
    if out is None:
        raise last_err

    mu = out[:TB].astype(jnp.float32).reshape(*lead_shape, action_size)
    return mu


def init_params(key, obs_dim, hidden_sizes, action_size):
    """Deterministic params matching the PyTorch module's shapes/default inits."""
    keys = jax.random.split(key, len(hidden_sizes) + 1)

    def linear(k, fan_in, fan_out):
        bound = 1.0 / np.sqrt(fan_in)
        kw, kb = jax.random.split(k)
        w = jax.random.uniform(kw, (fan_in, fan_out), jnp.float32, -bound, bound)
        b = jax.random.uniform(kb, (fan_out,), jnp.float32, -bound, bound)
        return w, b

    layers = []
    last = obs_dim
    for i, h in enumerate(hidden_sizes):
        w, b = linear(keys[i], last, h)
        layers.append(dict(w=w, b=b,
                           g=jnp.ones((h,), jnp.float32),
                           beta=jnp.zeros((h,), jnp.float32)))
        last = h
    wl, bl_ = linear(keys[-1], last, action_size)
    return dict(layers=layers, last=dict(w=wl, b=bl_))


def reference(params, observation, *, output_max=1.0, obs_ndim=1):
    """Pure-JAX f32 reference mirroring the PyTorch forward."""
    lead_shape = observation.shape[:observation.ndim - obs_ndim]
    D_in = int(np.prod(observation.shape[observation.ndim - obs_ndim:]))
    x = observation.reshape(-1, D_in).astype(jnp.float32)
    for l in params["layers"]:
        x = x @ l["w"] + l["b"]
        mu = x.mean(-1, keepdims=True)
        var = ((x - mu) ** 2).mean(-1, keepdims=True)
        x = (x - mu) / jnp.sqrt(var + EPS) * l["g"] + l["beta"]
        x = jnp.maximum(x, 0.0)
    out = x @ params["last"]["w"] + params["last"]["b"]
    A = out.shape[-1]
    return (output_max * jnp.tanh(out)).reshape(*lead_shape, A)


if __name__ == "__main__":
    key = jax.random.PRNGKey(0)
    obs_dim, action_size = 16, 4
    hidden_sizes = (32, 32)
    output_max = 1.0

    pkey, okey, okey2 = jax.random.split(key, 3)
    params = init_params(pkey, obs_dim, hidden_sizes, action_size)

    # Case 1: tiny batch (T*B = 2), default bf16-streaming path.
    T, B = 1, 2
    observation = jax.random.normal(okey, (T * B, obs_dim), jnp.float32)
    prev_action = jnp.zeros((T * B, action_size), jnp.float32)   # unused by forward
    prev_reward = jnp.zeros((T * B,), jnp.float32)               # unused by forward
    mu = mumlp_forward(params, observation, prev_action, prev_reward,
                       output_max=output_max)
    jax.block_until_ready(mu)
    mu_ref = reference(params, observation, output_max=output_max)
    np.testing.assert_allclose(np.asarray(mu), np.asarray(mu_ref),
                               atol=2e-2, rtol=2e-2)

    # Case 2: same inputs, f32 streaming path -> tight tolerance vs reference.
    mu32 = mumlp_forward(params, observation, prev_action, prev_reward,
                         output_max=output_max, compute_dtype=jnp.float32)
    jax.block_until_ready(mu32)
    np.testing.assert_allclose(np.asarray(mu32), np.asarray(mu_ref),
                               atol=2e-3, rtol=2e-3)

    # Case 3: multi-tile grid (forces grid > 1, balanced tiles + row padding).
    obs_big = jax.random.normal(okey2, (40, obs_dim), jnp.float32)
    mu_big = mumlp_forward(params, obs_big, output_max=output_max,
                           max_block_m=16)
    jax.block_until_ready(mu_big)
    mu_big_ref = reference(params, obs_big, output_max=output_max)
    np.testing.assert_allclose(np.asarray(mu_big), np.asarray(mu_big_ref),
                               atol=2e-2, rtol=2e-2)

    print("KERNEL_OK")
</pallas_src>

<mosaic_0001>
module attributes {stable_mosaic.version = 11 : i64} {
  func.func @kernel(%arg0: i32, %arg1: memref<16x16xbf16, #tpu.memory_space<vmem>>, %arg2: memref<8x32xf32, #tpu.memory_space<vmem>>, %arg3: memref<16x32xbf16, #tpu.memory_space<vmem>>, %arg4: memref<32x32xbf16, #tpu.memory_space<vmem>>, %arg5: memref<32x4xbf16, #tpu.memory_space<vmem>>, %arg6: memref<16x4xf32, #tpu.memory_space<vmem>>) attributes {dimension_semantics = [#tpu.dimension_semantics<parallel>], iteration_bounds = array<i64: 1>, scalar_prefetch = 0 : i64, scratch_operands = 0 : i64, tpu.core_type = #tpu.core_type<tc>, window_params = [{transform_indices = @transform_0, window_bounds = array<i64: 16, 16>}, {pipeline_mode = #tpu.pipeline_mode<synchronous>, transform_indices = @transform_1, window_bounds = array<i64: 8, 32>}, {pipeline_mode = #tpu.pipeline_mode<synchronous>, transform_indices = @transform_2, window_bounds = array<i64: 16, 32>}, {pipeline_mode = #tpu.pipeline_mode<synchronous>, transform_indices = @transform_3, window_bounds = array<i64: 32, 32>}, {pipeline_mode = #tpu.pipeline_mode<synchronous>, transform_indices = @transform_4, window_bounds = array<i64: 32, 4>}, {transform_indices = @transform_5, window_bounds = array<i64: 16, 4>}]} {
    %c0 = arith.constant 0 : index
    %c0_0 = arith.constant 0 : index
    %0 = vector.load %arg1[%c0, %c0_0] : memref<16x16xbf16, #tpu.memory_space<vmem>>, vector<16x16xbf16>
    %c0_1 = arith.constant 0 : index
    %c0_2 = arith.constant 0 : index
    %1 = vector.load %arg3[%c0_1, %c0_2] : memref<16x32xbf16, #tpu.memory_space<vmem>>, vector<16x32xbf16>
    %c0_3 = arith.constant 0 : index
    %c0_4 = arith.constant 0 : index
    %2 = vector.load %arg2[%c0_3, %c0_4] : memref<8x32xf32, #tpu.memory_space<vmem>>, vector<1x32xf32>
    %c1 = arith.constant 1 : index
    %c0_5 = arith.constant 0 : index
    %3 = vector.load %arg2[%c1, %c0_5] : memref<8x32xf32, #tpu.memory_space<vmem>>, vector<1x32xf32>
    %c2 = arith.constant 2 : index
    %c0_6 = arith.constant 0 : index
    %4 = vector.load %arg2[%c2, %c0_6] : memref<8x32xf32, #tpu.memory_space<vmem>>, vector<1x32xf32>
    %cst = arith.constant dense<0.000000e+00> : vector<16x32xf32>
    %5 = tpu.matmul %0, %1, %cst {dimension_numbers = #tpu.dot_dimension_numbers<[1], [0], [0], [1], [0, 0, 1, 1], [], []>} : vector<16x16xbf16>, vector<16x32xbf16>, vector<16x32xf32> -> vector<16x32xf32>
    %6 = vector.broadcast %2 : vector<1x32xf32> to vector<16x32xf32>
    %7 = arith.addf %5, %6 : vector<16x32xf32>
    %cst_7 = arith.constant dense<0.000000e+00> : vector<16xf32>
    %8 = vector.multi_reduction <add>, %7, %cst_7 [1] : vector<16x32xf32> to vector<16xf32>
    %9 = vector.shape_cast %8 : vector<16xf32> to vector<16x1xf32>
    %cst_8 = arith.constant 3.200000e+01 : f32
    %10 = vector.broadcast %cst_8 : f32 to vector<16x1xf32>
    %11 = arith.divf %9, %10 : vector<16x1xf32>
    %12 = arith.mulf %7, %7 : vector<16x32xf32>
    %cst_9 = arith.constant dense<0.000000e+00> : vector<16xf32>
    %13 = vector.multi_reduction <add>, %12, %cst_9 [1] : vector<16x32xf32> to vector<16xf32>
    %14 = vector.shape_cast %13 : vector<16xf32> to vector<16x1xf32>
    %cst_10 = arith.constant 3.200000e+01 : f32
    %15 = vector.broadcast %cst_10 : f32 to vector<16x1xf32>
    %16 = arith.divf %14, %15 : vector<16x1xf32>
    %17 = arith.mulf %11, %11 : vector<16x1xf32>
    %18 = arith.subf %16, %17 : vector<16x1xf32>
    %19 = vector.broadcast %11 : vector<16x1xf32> to vector<16x32xf32>
    %20 = arith.subf %7, %19 : vector<16x32xf32>
    %cst_11 = arith.constant 9.99999974E-6 : f32
    %21 = vector.broadcast %cst_11 : f32 to vector<16x1xf32>
    %22 = arith.addf %18, %21 : vector<16x1xf32>
    %23 = math.rsqrt %22 : vector<16x1xf32>
    %24 = vector.broadcast %23 : vector<16x1xf32> to vector<16x32xf32>
    %25 = vector.broadcast %3 : vector<1x32xf32> to vector<16x32xf32>
    %26 = arith.mulf %24, %25 : vector<16x32xf32>
    %27 = arith.mulf %20, %26 : vector<16x32xf32>
    %28 = vector.broadcast %4 : vector<1x32xf32> to vector<16x32xf32>
    %29 = arith.addf %27, %28 : vector<16x32xf32>
    %cst_12 = arith.constant 0.000000e+00 : f32
    %30 = vector.broadcast %cst_12 : f32 to vector<16x32xf32>
    %31 = arith.maximumf %29, %30 : vector<16x32xf32>
    %32 = arith.truncf %31 : vector<16x32xf32> to vector<16x32xbf16>
    %c0_13 = arith.constant 0 : index
    %c0_14 = arith.constant 0 : index
    %33 = vector.load %arg4[%c0_13, %c0_14] : memref<32x32xbf16, #tpu.memory_space<vmem>>, vector<32x32xbf16>
    %c3 = arith.constant 3 : index
    %c0_15 = arith.constant 0 : index
    %34 = vector.load %arg2[%c3, %c0_15] : memref<8x32xf32, #tpu.memory_space<vmem>>, vector<1x32xf32>
    %c4 = arith.constant 4 : index
    %c0_16 = arith.constant 0 : index
    %35 = vector.load %arg2[%c4, %c0_16] : memref<8x32xf32, #tpu.memory_space<vmem>>, vector<1x32xf32>
    %c5 = arith.constant 5 : index
    %c0_17 = arith.constant 0 : index
    %36 = vector.load %arg2[%c5, %c0_17] : memref<8x32xf32, #tpu.memory_space<vmem>>, vector<1x32xf32>
    %cst_18 = arith.constant dense<0.000000e+00> : vector<16x32xf32>
    %37 = tpu.matmul %32, %33, %cst_18 {dimension_numbers = #tpu.dot_dimension_numbers<[1], [0], [0], [1], [0, 0, 1, 1], [], []>} : vector<16x32xbf16>, vector<32x32xbf16>, vector<16x32xf32> -> vector<16x32xf32>
    %38 = vector.broadcast %34 : vector<1x32xf32> to vector<16x32xf32>
    %39 = arith.addf %37, %38 : vector<16x32xf32>
    %cst_19 = arith.constant dense<0.000000e+00> : vector<16xf32>
    %40 = vector.multi_reduction <add>, %39, %cst_19 [1] : vector<16x32xf32> to vector<16xf32>
    %41 = vector.shape_cast %40 : vector<16xf32> to vector<16x1xf32>
    %cst_20 = arith.constant 3.200000e+01 : f32
    %42 = vector.broadcast %cst_20 : f32 to vector<16x1xf32>
    %43 = arith.divf %41, %42 : vector<16x1xf32>
    %44 = arith.mulf %39, %39 : vector<16x32xf32>
    %cst_21 = arith.constant dense<0.000000e+00> : vector<16xf32>
    %45 = vector.multi_reduction <add>, %44, %cst_21 [1] : vector<16x32xf32> to vector<16xf32>
    %46 = vector.shape_cast %45 : vector<16xf32> to vector<16x1xf32>
    %cst_22 = arith.constant 3.200000e+01 : f32
    %47 = vector.broadcast %cst_22 : f32 to vector<16x1xf32>
    %48 = arith.divf %46, %47 : vector<16x1xf32>
    %49 = arith.mulf %43, %43 : vector<16x1xf32>
    %50 = arith.subf %48, %49 : vector<16x1xf32>
    %51 = vector.broadcast %43 : vector<16x1xf32> to vector<16x32xf32>
    %52 = arith.subf %39, %51 : vector<16x32xf32>
    %cst_23 = arith.constant 9.99999974E-6 : f32
    %53 = vector.broadcast %cst_23 : f32 to vector<16x1xf32>
    %54 = arith.addf %50, %53 : vector<16x1xf32>
    %55 = math.rsqrt %54 : vector<16x1xf32>
    %56 = vector.broadcast %55 : vector<16x1xf32> to vector<16x32xf32>
    %57 = vector.broadcast %35 : vector<1x32xf32> to vector<16x32xf32>
    %58 = arith.mulf %56, %57 : vector<16x32xf32>
    %59 = arith.mulf %52, %58 : vector<16x32xf32>
    %60 = vector.broadcast %36 : vector<1x32xf32> to vector<16x32xf32>
    %61 = arith.addf %59, %60 : vector<16x32xf32>
    %cst_24 = arith.constant 0.000000e+00 : f32
    %62 = vector.broadcast %cst_24 : f32 to vector<16x32xf32>
    %63 = arith.maximumf %61, %62 : vector<16x32xf32>
    %64 = arith.truncf %63 : vector<16x32xf32> to vector<16x32xbf16>
    %c0_25 = arith.constant 0 : index
    %c0_26 = arith.constant 0 : index
    %65 = vector.load %arg5[%c0_25, %c0_26] : memref<32x4xbf16, #tpu.memory_space<vmem>>, vector<32x4xbf16>
    %c6 = arith.constant 6 : index
    %c0_27 = arith.constant 0 : index
    %66 = vector.load %arg2[%c6, %c0_27] : memref<8x32xf32, #tpu.memory_space<vmem>>, vector<1x4xf32>
    %cst_28 = arith.constant dense<0.000000e+00> : vector<16x4xf32>
    %67 = tpu.matmul %64, %65, %cst_28 {dimension_numbers = #tpu.dot_dimension_numbers<[1], [0], [0], [1], [0, 0, 1, 1], [], []>} : vector<16x32xbf16>, vector<32x4xbf16>, vector<16x4xf32> -> vector<16x4xf32>
    %68 = vector.broadcast %66 : vector<1x4xf32> to vector<16x4xf32>
    %69 = arith.addf %67, %68 : vector<16x4xf32>
    %70 = math.tanh %69 : vector<16x4xf32>
    %cst_29 = arith.constant 1.000000e+00 : f32
    %71 = vector.broadcast %cst_29 : f32 to vector<16x4xf32>
    %72 = arith.mulf %71, %70 : vector<16x4xf32>
    %c0_30 = arith.constant 0 : index
    %c0_31 = arith.constant 0 : index
    %73 = vector.load %arg6[%c0_30, %c0_31] : memref<16x4xf32, #tpu.memory_space<vmem>>, vector<16x4xf32>
    tpu.vector_store %arg6[%c0_30, %c0_31], %72 {strides = array<i32>} : memref<16x4xf32, #tpu.memory_space<vmem>>, vector<16x4xf32>,
    return
  }
  func.func @transform_0(%arg0: i32) -> (i32, i32) {
    %c0_i32 = arith.constant 0 : i32
    %c0_i32_0 = arith.constant 0 : i32
    return %arg0, %c0_i32 : i32, i32
  }
  func.func @transform_1(%arg0: i32) -> (i32, i32) {
    %c0_i32 = arith.constant 0 : i32
    %c0_i32_0 = arith.constant 0 : i32
    %c0_i32_1 = arith.constant 0 : i32
    return %c0_i32, %c0_i32_0 : i32, i32
  }
  func.func @transform_2(%arg0: i32) -> (i32, i32) {
    %c0_i32 = arith.constant 0 : i32
    %c0_i32_0 = arith.constant 0 : i32
    %c0_i32_1 = arith.constant 0 : i32
    return %c0_i32, %c0_i32_0 : i32, i32
  }
  func.func @transform_3(%arg0: i32) -> (i32, i32) {
    %c0_i32 = arith.constant 0 : i32
    %c0_i32_0 = arith.constant 0 : i32
    %c0_i32_1 = arith.constant 0 : i32
    return %c0_i32, %c0_i32_0 : i32, i32
  }
  func.func @transform_4(%arg0: i32) -> (i32, i32) {
    %c0_i32 = arith.constant 0 : i32
    %c0_i32_0 = arith.constant 0 : i32
    %c0_i32_1 = arith.constant 0 : i32
    return %c0_i32, %c0_i32_0 : i32, i32
  }
  func.func @transform_5(%arg0: i32) -> (i32, i32) {
    %c0_i32 = arith.constant 0 : i32
    %c0_i32_0 = arith.constant 0 : i32
    return %arg0, %c0_i32 : i32, i32
  }
}

module attributes {stable_mosaic.version = 11 : i64} {
  func.func @kernel(%arg0: i32, %arg1: memref<16x16xbf16, #tpu.memory_space<vmem>>, %arg2: memref<8x32xf32, #tpu.memory_space<vmem>>, %arg3: memref<16x32xbf16, #tpu.memory_space<vmem>>, %arg4: memref<32x32xbf16, #tpu.memory_space<vmem>>, %arg5: memref<32x4xbf16, #tpu.memory_space<vmem>>, %arg6: memref<16x4xf32, #tpu.memory_space<vmem>>) attributes {dimension_semantics = [#tpu.dimension_semantics<parallel>], iteration_bounds = array<i64: 1>, scalar_prefetch = 0 : i64, scratch_operands = 0 : i64, tpu.core_type = #tpu.core_type<tc>, window_params = [{transform_indices = @transform_0, window_bounds = array<i64: 16, 16>}, {pipeline_mode = #tpu.pipeline_mode<synchronous>, transform_indices = @transform_1, window_bounds = array<i64: 8, 32>}, {pipeline_mode = #tpu.pipeline_mode<synchronous>, transform_indices = @transform_2, window_bounds = array<i64: 16, 32>}, {pipeline_mode = #tpu.pipeline_mode<synchronous>, transform_indices = @transform_3, window_bounds = array<i64: 32, 32>}, {pipeline_mode = #tpu.pipeline_mode<synchronous>, transform_indices = @transform_4, window_bounds = array<i64: 32, 4>}, {transform_indices = @transform_5, window_bounds = array<i64: 16, 4>}]} {
    %c0 = arith.constant 0 : index
    %c0_0 = arith.constant 0 : index
    %0 = vector.load %arg1[%c0, %c0_0] : memref<16x16xbf16, #tpu.memory_space<vmem>>, vector<16x16xbf16>
    %c0_1 = arith.constant 0 : index
    %c0_2 = arith.constant 0 : index
    %1 = vector.load %arg3[%c0_1, %c0_2] : memref<16x32xbf16, #tpu.memory_space<vmem>>, vector<16x32xbf16>
    %c0_3 = arith.constant 0 : index
    %c0_4 = arith.constant 0 : index
    %2 = vector.load %arg2[%c0_3, %c0_4] : memref<8x32xf32, #tpu.memory_space<vmem>>, vector<1x32xf32>
    %c1 = arith.constant 1 : index
    %c0_5 = arith.constant 0 : index
    %3 = vector.load %arg2[%c1, %c0_5] : memref<8x32xf32, #tpu.memory_space<vmem>>, vector<1x32xf32>
    %c2 = arith.constant 2 : index
    %c0_6 = arith.constant 0 : index
    %4 = vector.load %arg2[%c2, %c0_6] : memref<8x32xf32, #tpu.memory_space<vmem>>, vector<1x32xf32>
    %cst = arith.constant dense<0.000000e+00> : vector<16x32xf32>
    %5 = tpu.matmul %0, %1, %cst {dimension_numbers = #tpu.dot_dimension_numbers<[1], [0], [0], [1], [0, 0, 1, 1], [], []>} : vector<16x16xbf16>, vector<16x32xbf16>, vector<16x32xf32> -> vector<16x32xf32>
    %6 = vector.broadcast %2 : vector<1x32xf32> to vector<16x32xf32>
    %7 = arith.addf %5, %6 : vector<16x32xf32>
    %cst_7 = arith.constant dense<0.000000e+00> : vector<16xf32>
    %8 = vector.multi_reduction <add>, %7, %cst_7 [1] : vector<16x32xf32> to vector<16xf32>
    %9 = vector.shape_cast %8 : vector<16xf32> to vector<16x1xf32>
    %cst_8 = arith.constant 3.200000e+01 : f32
    %10 = vector.broadcast %cst_8 : f32 to vector<16x1xf32>
    %11 = arith.divf %9, %10 : vector<16x1xf32>
    %12 = arith.mulf %7, %7 : vector<16x32xf32>
    %cst_9 = arith.constant dense<0.000000e+00> : vector<16xf32>
    %13 = vector.multi_reduction <add>, %12, %cst_9 [1] : vector<16x32xf32> to vector<16xf32>
    %14 = vector.shape_cast %13 : vector<16xf32> to vector<16x1xf32>
    %cst_10 = arith.constant 3.200000e+01 : f32
    %15 = vector.broadcast %cst_10 : f32 to vector<16x1xf32>
    %16 = arith.divf %14, %15 : vector<16x1xf32>
    %17 = arith.mulf %11, %11 : vector<16x1xf32>
    %18 = arith.subf %16, %17 : vector<16x1xf32>
    %19 = vector.broadcast %11 : vector<16x1xf32> to vector<16x32xf32>
    %20 = arith.subf %7, %19 : vector<16x32xf32>
    %cst_11 = arith.constant 9.99999974E-6 : f32
    %21 = vector.broadcast %cst_11 : f32 to vector<16x1xf32>
    %22 = arith.addf %18, %21 : vector<16x1xf32>
    %23 = math.rsqrt %22 : vector<16x1xf32>
    %24 = vector.broadcast %23 : vector<16x1xf32> to vector<16x32xf32>
    %25 = vector.broadcast %3 : vector<1x32xf32> to vector<16x32xf32>
    %26 = arith.mulf %24, %25 : vector<16x32xf32>
    %27 = arith.mulf %20, %26 : vector<16x32xf32>
    %28 = vector.broadcast %4 : vector<1x32xf32> to vector<16x32xf32>
    %29 = arith.addf %27, %28 : vector<16x32xf32>
    %cst_12 = arith.constant 0.000000e+00 : f32
    %30 = vector.broadcast %cst_12 : f32 to vector<16x32xf32>
    %31 = arith.maximumf %29, %30 : vector<16x32xf32>
    %32 = arith.truncf %31 : vector<16x32xf32> to vector<16x32xbf16>
    %c0_13 = arith.constant 0 : index
    %c0_14 = arith.constant 0 : index
    %33 = vector.load %arg4[%c0_13, %c0_14] : memref<32x32xbf16, #tpu.memory_space<vmem>>, vector<32x32xbf16>
    %c3 = arith.constant 3 : index
    %c0_15 = arith.constant 0 : index
    %34 = vector.load %arg2[%c3, %c0_15] : memref<8x32xf32, #tpu.memory_space<vmem>>, vector<1x32xf32>
    %c4 = arith.constant 4 : index
    %c0_16 = arith.constant 0 : index
    %35 = vector.load %arg2[%c4, %c0_16] : memref<8x32xf32, #tpu.memory_space<vmem>>, vector<1x32xf32>
    %c5 = arith.constant 5 : index
    %c0_17 = arith.constant 0 : index
    %36 = vector.load %arg2[%c5, %c0_17] : memref<8x32xf32, #tpu.memory_space<vmem>>, vector<1x32xf32>
    %cst_18 = arith.constant dense<0.000000e+00> : vector<16x32xf32>
    %37 = tpu.matmul %32, %33, %cst_18 {dimension_numbers = #tpu.dot_dimension_numbers<[1], [0], [0], [1], [0, 0, 1, 1], [], []>} : vector<16x32xbf16>, vector<32x32xbf16>, vector<16x32xf32> -> vector<16x32xf32>
    %38 = vector.broadcast %34 : vector<1x32xf32> to vector<16x32xf32>
    %39 = arith.addf %37, %38 : vector<16x32xf32>
    %cst_19 = arith.constant dense<0.000000e+00> : vector<16xf32>
    %40 = vector.multi_reduction <add>, %39, %cst_19 [1] : vector<16x32xf32> to vector<16xf32>
    %41 = vector.shape_cast %40 : vector<16xf32> to vector<16x1xf32>
    %cst_20 = arith.constant 3.200000e+01 : f32
    %42 = vector.broadcast %cst_20 : f32 to vector<16x1xf32>
    %43 = arith.divf %41, %42 : vector<16x1xf32>
    %44 = arith.mulf %39, %39 : vector<16x32xf32>
    %cst_21 = arith.constant dense<0.000000e+00> : vector<16xf32>
    %45 = vector.multi_reduction <add>, %44, %cst_21 [1] : vector<16x32xf32> to vector<16xf32>
    %46 = vector.shape_cast %45 : vector<16xf32> to vector<16x1xf32>
    %cst_22 = arith.constant 3.200000e+01 : f32
    %47 = vector.broadcast %cst_22 : f32 to vector<16x1xf32>
    %48 = arith.divf %46, %47 : vector<16x1xf32>
    %49 = arith.mulf %43, %43 : vector<16x1xf32>
    %50 = arith.subf %48, %49 : vector<16x1xf32>
    %51 = vector.broadcast %43 : vector<16x1xf32> to vector<16x32xf32>
    %52 = arith.subf %39, %51 : vector<16x32xf32>
    %cst_23 = arith.constant 9.99999974E-6 : f32
    %53 = vector.broadcast %cst_23 : f32 to vector<16x1xf32>
    %54 = arith.addf %50, %53 : vector<16x1xf32>
    %55 = math.rsqrt %54 : vector<16x1xf32>
    %56 = vector.broadcast %55 : vector<16x1xf32> to vector<16x32xf32>
    %57 = vector.broadcast %35 : vector<1x32xf32> to vector<16x32xf32>
    %58 = arith.mulf %56, %57 : vector<16x32xf32>
    %59 = arith.mulf %52, %58 : vector<16x32xf32>
    %60 = vector.broadcast %36 : vector<1x32xf32> to vector<16x32xf32>
    %61 = arith.addf %59, %60 : vector<16x32xf32>
    %cst_24 = arith.constant 0.000000e+00 : f32
    %62 = vector.broadcast %cst_24 : f32 to vector<16x32xf32>
    %63 = arith.maximumf %61, %62 : vector<16x32xf32>
    %64 = arith.truncf %63 : vector<16x32xf32> to vector<16x32xbf16>
    %c0_25 = arith.constant 0 : index
    %c0_26 = arith.constant 0 : index
    %65 = vector.load %arg5[%c0_25, %c0_26] : memref<32x4xbf16, #tpu.memory_space<vmem>>, vector<32x4xbf16>
    %c6 = arith.constant 6 : index
    %c0_27 = arith.constant 0 : index
    %66 = vector.load %arg2[%c6, %c0_27] : memref<8x32xf32, #tpu.memory_space<vmem>>, vector<1x4xf32>
    %cst_28 = arith.constant dense<0.000000e+00> : vector<16x4xf32>
    %67 = tpu.matmul %64, %65, %cst_28 {dimension_numbers = #tpu.dot_dimension_numbers<[1], [0], [0], [1], [0, 0, 1, 1], [], []>} : vector<16x32xbf16>, vector<32x4xbf16>, vector<16x4xf32> -> vector<16x4xf32>
    %68 = vector.broadcast %66 : vector<1x4xf32> to vector<16x4xf32>
    %69 = arith.addf %67, %68 : vector<16x4xf32>
    %70 = math.tanh %69 : vector<16x4xf32>
    %cst_29 = arith.constant 1.000000e+00 : f32
    %71 = vector.broadcast %cst_29 : f32 to vector<16x4xf32>
    %72 = arith.mulf %71, %70 : vector<16x4xf32>
    %c0_30 = arith.constant 0 : index
    %c0_31 = arith.constant 0 : index
    %73 = vector.load %arg6[%c0_30, %c0_31] : memref<16x4xf32, #tpu.memory_space<vmem>>, vector<16x4xf32>
    tpu.vector_store %arg6[%c0_30, %c0_31], %72 {strides = array<i32>} : memref<16x4xf32, #tpu.memory_space<vmem>>, vector<16x4xf32>,
    return
  }
  func.func @transform_0(%arg0: i32) -> (i32, i32) {
    %c0_i32 = arith.constant 0 : i32
    %c0_i32_0 = arith.constant 0 : i32
    return %arg0, %c0_i32 : i32, i32
  }
  func.func @transform_1(%arg0: i32) -> (i32, i32) {
    %c0_i32 = arith.constant 0 : i32
    %c0_i32_0 = arith.constant 0 : i32
    %c0_i32_1 = arith.constant 0 : i32
    return %c0_i32, %c0_i32_0 : i32, i32
  }
  func.func @transform_2(%arg0: i32) -> (i32, i32) {
    %c0_i32 = arith.constant 0 : i32
    %c0_i32_0 = arith.constant 0 : i32
    %c0_i32_1 = arith.constant 0 : i32
    return %c0_i32, %c0_i32_0 : i32, i32
  }
  func.func @transform_3(%arg0: i32) -> (i32, i32) {
    %c0_i32 = arith.constant 0 : i32
    %c0_i32_0 = arith.constant 0 : i32
    %c0_i32_1 = arith.constant 0 : i32
    return %c0_i32, %c0_i32_0 : i32, i32
  }
  func.func @transform_4(%arg0: i32) -> (i32, i32) {
    %c0_i32 = arith.constant 0 : i32
    %c0_i32_0 = arith.constant 0 : i32
    %c0_i32_1 = arith.constant 0 : i32
    return %c0_i32, %c0_i32_0 : i32, i32
  }
  func.func @transform_5(%arg0: i32) -> (i32, i32) {
    %c0_i32 = arith.constant 0 : i32
    %c0_i32_0 = arith.constant 0 : i32
    return %arg0, %c0_i32 : i32, i32
  }
}

</mosaic_0001>

<llo_original>
// kernel: tpu_custom_call.1
$region0: #{tpu_custom_call.1}
  #allocation0 [shape = 'u32[]', space=smem, size = 0x4, offset = 0x4, fixed_abs, tag = 'smem constant byte address 0x4 - core index']
  #allocation1 [shape = 'u32[72,128]{1,0:T(1,128)}', space=vmem, size = 0x9000, scoped, tag = 'internal scratch']
  %s0 = inlined_call_operand.hbm [shape: bf16[16,16], index: 0, kind: input, shape index: {}]
  %s1 = inlined_call_operand.hbm [shape: f32[8,32], index: 1, kind: input, shape index: {}]
  %s2 = inlined_call_operand.hbm [shape: bf16[16,32], index: 2, kind: input, shape index: {}]
  %s3 = inlined_call_operand.vmem [shape: bf16[32,32], index: 3, kind: input, shape index: {}]
  %s4 = inlined_call_operand.vmem [shape: bf16[32,4], index: 4, kind: input, shape index: {}]
  %s5 = inlined_call_operand.vmem [shape: f32[16,4], index: 5, kind: output, shape index: {}]
  %s6 = sld [smem:[#allocation0]]
  $region42: #{tpu_custom_call.1} parent=0
    _
  %s8 = ssub.s32 1, %s6
  %s9 = scalar_select 0, %s8, %s6
  $region1: #{tpu_custom_call.1} parent=0
    #allocation2 [shape = 'u8[4096]{0}', space=vmem, size = 0x1000, scoped, tag = 'input window, operand 0, single buffered']
    #allocation3 [shape = 's32[1]{0}', space=sflag, size = 0x4, scoped, tag = 'scoped memory for tpu_custom_call.1']
    #allocation4 [shape = 'u8[4096]{0}', space=vmem, size = 0x1000, scoped, tag = 'input window, operand 1, single buffered']
    #allocation5 [shape = 's32[1]{0}', space=sflag, size = 0x4, scoped, tag = 'scoped memory for tpu_custom_call.1']
    #allocation6 [shape = 'u8[4096]{0}', space=vmem, size = 0x1000, scoped, tag = 'input window, operand 2, single buffered']
    %10 = vsyncpa [#allocation3], 0
    %11 = vsyncpa [#allocation5], 0
    // Predicated region
    $region2: #{tpu_custom_call.1} parent=1 // pred_check
      _
    $region3: #{tpu_custom_call.1} parent=1 // pred_check_branch
      %13 = sbr.rel (0) target = $region5
    $region4: #{tpu_custom_call.1} parent=1 // pred_region
      %15 = vsyncadd [#allocation3], 0
      %s16 = sshll.u32 %s0, 4
      %s17 = int_to_ptr.hbm [resolvable:$true] %s16
      %s18 = sshll.u32 [#allocation2], 4
      %s19 = int_to_ptr.vmem [resolvable:$true] %s18
      %24 = dma.hbm_to_vmem [thread:$0]  %s17, 128, %s19, [#allocation3], 64, 64, 4
    $region5: #{tpu_custom_call.1} parent=1 // pred_fallthru
      _
    // Predicated region
    $region6: #{tpu_custom_call.1} parent=1 // pred_check
      _
    $region7: #{tpu_custom_call.1} parent=1 // pred_check_branch
      %26 = sbr.rel (0) target = $region9
    $region8: #{tpu_custom_call.1} parent=1 // pred_region
      %28 = vsyncadd [#allocation5], 0
      %s30 = sshll.u32 %s1, 4
      %s31 = int_to_ptr.hbm [resolvable:$true] %s30
      %s32 = sshll.u32 [#allocation4], 4
      %s33 = int_to_ptr.vmem [resolvable:$true] %s32
      %35 = dma.hbm_to_vmem [thread:$0]  %s31, 128, %s33, [#allocation5]
    $region9: #{tpu_custom_call.1} parent=1 // pred_fallthru
      _
    // Predicated region
    $region10: #{tpu_custom_call.1} parent=1 // pred_check
      _
    $region11: #{tpu_custom_call.1} parent=1 // pred_check_branch
      %37 = sbr.rel (0) target = $region13
    $region12: #{tpu_custom_call.1} parent=1 // pred_region
      %39 = vsyncadd [#allocation5], 0
      %s40 = sshll.u32 %s2, 4
      %s41 = int_to_ptr.hbm [resolvable:$true] %s40
      %s42 = sshll.u32 [#allocation6], 4
      %s43 = int_to_ptr.vmem [resolvable:$true] %s42
      %48 = dma.hbm_to_vmem [thread:$0]  %s41, 128, %s43, [#allocation5], 64, 64, 4
    $region13: #{tpu_custom_call.1} parent=1 // pred_fallthru
      _
    // Predicated region
    $region14: #{tpu_custom_call.1} parent=1 // pred_check
      _
    $region15: #{tpu_custom_call.1} parent=1 // pred_check_branch
      %50 = sbr.rel (0) target = $region17
    $region16: #{tpu_custom_call.1} parent=1 // pred_region
      _
    $region17: #{tpu_custom_call.1} parent=1 // pred_fallthru
      _
    // Predicated region
    $region18: #{tpu_custom_call.1} parent=1 // pred_check
      _
    $region19: #{tpu_custom_call.1} parent=1 // pred_check_branch
      %52 = sbr.rel (0) target = $region21
    $region20: #{tpu_custom_call.1} parent=1 // pred_region
      _
    $region21: #{tpu_custom_call.1} parent=1 // pred_fallthru
      _
    // Predicated region
    $region22: #{tpu_custom_call.1} parent=1 // pred_check
      _
    $region23: #{tpu_custom_call.1} parent=1 // pred_check_branch
      %54 = sbr.rel (0) target = $region25
    $region24: #{tpu_custom_call.1} parent=1 // pred_region
      %56 = dma.done [#allocation3], 128
    $region25: #{tpu_custom_call.1} parent=1 // pred_fallthru
      _
    // Predicated region
    $region26: #{tpu_custom_call.1} parent=1 // pred_check
      _
    $region27: #{tpu_custom_call.1} parent=1 // pred_check_branch
      %58 = sbr.rel (0) target = $region29
    $region28: #{tpu_custom_call.1} parent=1 // pred_region
      %60 = dma.done [#allocation5], 128
    $region29: #{tpu_custom_call.1} parent=1 // pred_fallthru
      _
    // Predicated region
    $region30: #{tpu_custom_call.1} parent=1 // pred_check
      _
    $region31: #{tpu_custom_call.1} parent=1 // pred_check_branch
      %62 = sbr.rel (0) target = $region33
    $region32: #{tpu_custom_call.1} parent=1 // pred_region
      %64 = dma.done [#allocation5], 128
    $region33: #{tpu_custom_call.1} parent=1 // pred_fallthru
      _
    %v66 = vld [vmem:[#allocation2] sm:$0xf]
    %v67 = vld [vmem:[#allocation2 + $0x4] sm:$0xf]
    %v68 = vld [vmem:[#allocation6] sm:$0xf]
    %v69 = vld [vmem:[#allocation6 + $0x4] sm:$0xf]
    %v70 = vld [vmem:[#allocation4] sm:$0x1]
    %v71 = vld [vmem:[#allocation4 + $0x1] sm:$0x1]
    %v72 = vld [vmem:[#allocation4 + $0x2] sm:$0x1]
    %v73 = vperm.slane %v70, 0
    %v76 = vunpack.c.l.b16 %v66
    %v77 = vunpack.c.l.b16 %v67
    %v78 = vpack.c.b16 %v77, %v76
    %v81 = vunpack.c.l.b16 %v68
    %v82 = vunpack.c.l.b16 %v69
    %v83 = vpack.c.b16 %v82, %v81
    %vm85 = vcmask 130048
    %v87 = vsel %vm85, %v78, 0
    %89 = vmatpush.bf16.msra.mxu0 0
    %90 = vmatpush.bf16.msra.mxu0 0
    %91 = vmatpush.bf16.msra.mxu0 0
    %92 = vmatpush.bf16.msra.mxu0 0
    %93 = vmatpush.bf16.msra.mxu0 0
    %94 = vmatpush.bf16.msra.mxu0 0
    %95 = vmatpush.bf16.msra.mxu0 0
    %96 = vmatpush.bf16.msra.mxu0 %v83
    %97 = vmatmul.bf16.gmra.mxu0 %v87
    %v98 = vpop.f32.mrf.mxu0
    %v99 = vadd.f32 %v73, %v98
    %v100 = vpop.f32.mrf.mxu0
    %v101 = vadd.f32 %v73, %v100
    %102 = vdwg.mxu0
    %vm103 = vcmask 261120
    %v104 = vsel %vm103, %v99, 0.0
    %105 = vadd.xlane.f32.xlu0 %v104
    %v106 = vpop.xlane.xlu0 %105
    %v107 = vsel %vm103, %v101, 0.0
    %108 = vadd.xlane.f32.xlu0 %v107
    %v109 = vpop.xlane.xlu0 %108
    %v110 = vrcp.pop 32.0
    %v111 = vmul.f32 32.0, %v110
    %v112 = vsub.f32 1.0, %v111
    %v113 = vmul.f32 %v110, %v112
    %v114 = vadd.f32 %v110, %v113
    %vm115 = vweird.f32 %v110
    %v116 = vsel %vm115, %v110, %v114
    %v117 = vmul.f32 %v106, %v116
    %v118 = vmul.f32 %v109, %v116
    %v119 = vmul.f32 %v99, %v99
    %v120 = vmul.f32 %v101, %v101
    %v121 = vsel %vm103, %v119, 0.0
    %122 = vadd.xlane.f32.xlu0 %v121
    %v123 = vpop.xlane.xlu0 %122
    %v124 = vsel %vm103, %v120, 0.0
    %125 = vadd.xlane.f32.xlu0 %v124
    %v126 = vpop.xlane.xlu0 %125
    %v127 = vmul.f32 %v123, %v116
    %v128 = vmul.f32 %v126, %v116
    %v129 = vmul.f32 %v117, %v117
    %v130 = vmul.f32 %v118, %v118
    %v131 = vsub.f32 %v127, %v129
    %v132 = vsub.f32 %v128, %v130
    %v133 = vsub.f32 %v99, %v117
    %v134 = vsub.f32 %v101, %v118
    %v135 = vadd.f32 %v131, 1e-05
    %v136 = vadd.f32 %v132, 1e-05
    %v137 = vrsqrt.pop %v135
    %v138 = vmul.f32 %v137, %v135
    %v139 = vmul.f32 %v138, %v137
    %v140 = vmul.f32 0.5, %v139
    %v141 = vsub.f32 1.5, %v140
    %v142 = vmul.f32 %v137, %v141
    %vm143 = vweird.f32 %v135
    %vm144 = vweird.f32 %v137
    %vm145 = vmor %vm143, %vm144
    %v146 = vsel %vm145, %v137, %v142
    %v147 = vrsqrt.pop %v136
    %v148 = vmul.f32 %v147, %v136
    %v149 = vmul.f32 %v148, %v147
    %v150 = vmul.f32 0.5, %v149
    %v151 = vsub.f32 1.5, %v150
    %v152 = vmul.f32 %v147, %v151
    %vm153 = vweird.f32 %v136
    %vm154 = vweird.f32 %v147
    %vm155 = vmor %vm153, %vm154
    %v156 = vsel %vm155, %v147, %v152
    %v157 = vperm.slane %v71, 0
    %v158 = vmul.f32 %v146, %v157
    %v159 = vmul.f32 %v156, %v157
    %v160 = vmul.f32 %v133, %v158
    %v161 = vmul.f32 %v134, %v159
    %v162 = vperm.slane %v72, 0
    %v163 = vadd.f32 %v160, %v162
    %v164 = vadd.f32 %v161, %v162
    %v165 = vmax.f32 %v163, 0.0
    %v166 = vmax.f32 %v164, 0.0
    %v167 = vpack.c.bf16 %v166, %v165
    %v168 = vld [vmem:[%s3] sm:$0xf]
    %v169 = vld [vmem:[%s3 + $0x4] sm:$0xf]
    %v170 = vld [vmem:[%s3 + $0x8] sm:$0xf]
    %v171 = vld [vmem:[%s3 + $0xc] sm:$0xf]
    %v172 = vld [vmem:[#allocation4 + $0x3] sm:$0x1]
    %v173 = vld [vmem:[#allocation4 + $0x4] sm:$0x1]
    %v174 = vld [vmem:[#allocation4 + $0x5] sm:$0x1]
    %v175 = vperm.slane %v172, 0
    %v180 = vunpack.c.l.b16 %v168
    %v181 = vunpack.c.l.b16 %v169
    %v182 = vunpack.c.l.b16 %v170
    %v183 = vunpack.c.l.b16 %v171
    %v184 = vpack.c.b16 %v181, %v180
    %v185 = vpack.c.b16 %v183, %v182
    %v189 = vsel %vm103, %v167, 0
    %191 = vmatpush.bf16.msra.mxu0 0
    %192 = vmatpush.bf16.msra.mxu0 0
    %193 = vmatpush.bf16.msra.mxu0 0
    %194 = vmatpush.bf16.msra.mxu0 0
    %195 = vmatpush.bf16.msra.mxu0 0
    %196 = vmatpush.bf16.msra.mxu0 0
    %197 = vmatpush.bf16.msra.mxu0 %v185
    %198 = vmatpush.bf16.msra.mxu0 %v184
    %199 = vmatmul.bf16.gmra.mxu0 %v189
    %v200 = vpop.f32.mrf.mxu0
    %v201 = vadd.f32 %v175, %v200
    %v202 = vpop.f32.mrf.mxu0
    %v203 = vadd.f32 %v175, %v202
    %204 = vdwg.mxu0
    %v205 = vsel %vm103, %v201, 0.0
    %206 = vadd.xlane.f32.xlu0 %v205
    %v207 = vpop.xlane.xlu0 %206
    %v208 = vsel %vm103, %v203, 0.0
    %209 = vadd.xlane.f32.xlu0 %v208
    %v210 = vpop.xlane.xlu0 %209
    %v211 = vmul.f32 %v207, %v116
    %v212 = vmul.f32 %v210, %v116
    %v213 = vmul.f32 %v201, %v201
    %v214 = vmul.f32 %v203, %v203
    %v215 = vsel %vm103, %v213, 0.0
    %216 = vadd.xlane.f32.xlu0 %v215
    %v217 = vpop.xlane.xlu0 %216
    %v218 = vsel %vm103, %v214, 0.0
    %219 = vadd.xlane.f32.xlu0 %v218
    %v220 = vpop.xlane.xlu0 %219
    %v221 = vmul.f32 %v217, %v116
    %v222 = vmul.f32 %v220, %v116
    %v223 = vmul.f32 %v211, %v211
    %v224 = vmul.f32 %v212, %v212
    %v225 = vsub.f32 %v221, %v223
    %v226 = vsub.f32 %v222, %v224
    %v227 = vsub.f32 %v201, %v211
    %v228 = vsub.f32 %v203, %v212
    %v229 = vadd.f32 %v225, 1e-05
    %v230 = vadd.f32 %v226, 1e-05
    %v231 = vrsqrt.pop %v229
    %v232 = vmul.f32 %v231, %v229
    %v233 = vmul.f32 %v232, %v231
    %v234 = vmul.f32 0.5, %v233
    %v235 = vsub.f32 1.5, %v234
    %v236 = vmul.f32 %v231, %v235
    %vm237 = vweird.f32 %v229
    %vm238 = vweird.f32 %v231
    %vm239 = vmor %vm237, %vm238
    %v240 = vsel %vm239, %v231, %v236
    %v241 = vrsqrt.pop %v230
    %v242 = vmul.f32 %v241, %v230
    %v243 = vmul.f32 %v242, %v241
    %v244 = vmul.f32 0.5, %v243
    %v245 = vsub.f32 1.5, %v244
    %v246 = vmul.f32 %v241, %v245
    %vm247 = vweird.f32 %v230
    %vm248 = vweird.f32 %v241
    %vm249 = vmor %vm247, %vm248
    %v250 = vsel %vm249, %v241, %v246
    %v251 = vperm.slane %v173, 0
    %v252 = vmul.f32 %v240, %v251
    %v253 = vmul.f32 %v250, %v251
    %v254 = vmul.f32 %v227, %v252
    %v255 = vmul.f32 %v228, %v253
    %v256 = vperm.slane %v174, 0
    %v257 = vadd.f32 %v254, %v256
    %v258 = vadd.f32 %v255, %v256
    %v259 = vmax.f32 %v257, 0.0
    %v260 = vmax.f32 %v258, 0.0
    %v261 = vpack.c.bf16 %v260, %v259
    %v262 = vld [vmem:[%s4] sm:$0xf]
    %v263 = vld [vmem:[%s4 + $0x4] sm:$0xf]
    %v264 = vld [vmem:[%s4 + $0x8] sm:$0xf]
    %v265 = vld [vmem:[%s4 + $0xc] sm:$0xf]
    %v266 = vld [vmem:[#allocation4 + $0x6] sm:$0x1]
    %v267 = vperm.slane %v266, 0
    %v272 = vunpack.c.l.b16 %v262
    %v273 = vunpack.c.l.b16 %v263
    %v274 = vunpack.c.l.b16 %v264
    %v275 = vunpack.c.l.b16 %v265
    %v276 = vpack.c.b16 %v273, %v272
    %v277 = vpack.c.b16 %v275, %v274
    %v281 = vsel %vm103, %v261, 0
    %283 = vmatpush.bf16.msra.mxu0 0
    %284 = vmatpush.bf16.msra.mxu0 0
    %285 = vmatpush.bf16.msra.mxu0 0
    %286 = vmatpush.bf16.msra.mxu0 0
    %287 = vmatpush.bf16.msra.mxu0 0
    %288 = vmatpush.bf16.msra.mxu0 0
    %289 = vmatpush.bf16.msra.mxu0 %v277
    %290 = vmatpush.bf16.msra.mxu0 %v276
    %291 = vmatmul.bf16.gmra.mxu0 %v281
    %v292 = vpop.f32.mrf.mxu0
    %v293 = vadd.f32 %v267, %v292
    %v294 = vpop.f32.mrf.mxu0
    %v295 = vadd.f32 %v267, %v294
    %296 = vdwg.mxu0
    %v297 = vtanh.pop %v293
    %v298 = vtanh.pop %v295
    %vm299 = vcmask 31744
    %300 = vst.msk [vmem:[%s5] sm:$0xff] %vm299, %v297
    %301 = vst.msk [vmem:[%s5 + $0x8] sm:$0xff] %vm299, %v298
    // Predicated region
    $region34: #{tpu_custom_call.1} parent=1 // pred_check
      _
    $region35: #{tpu_custom_call.1} parent=1 // pred_check_branch
      %303 = sbr.rel (0) target = $region37
    $region36: #{tpu_custom_call.1} parent=1 // pred_region
      _
    $region37: #{tpu_custom_call.1} parent=1 // pred_fallthru
      _
    // Predicated region
    $region38: #{tpu_custom_call.1} parent=1 // pred_check
      _
    $region39: #{tpu_custom_call.1} parent=1 // pred_check_branch
      %305 = sbr.rel (0) target = $region41
    $region40: #{tpu_custom_call.1} parent=1 // pred_region
      _
    $region41: #{tpu_custom_call.1} parent=1 // pred_fallthru
      _
    %306 = vsyncpa [#allocation3], 1
    %307 = vsyncpa [#allocation5], 1

// kernel: tpu_custom_call.1
$region0: #{tpu_custom_call.1}
  #allocation0 [shape = 'u32[]', space=smem, size = 0x4, offset = 0x4, fixed_abs, tag = 'smem constant byte address 0x4 - core index']
  #allocation1 [shape = 'u32[72,128]{1,0:T(1,128)}', space=vmem, size = 0x9000, scoped, tag = 'internal scratch']
  %s0 = inlined_call_operand.hbm [shape: bf16[16,16], index: 0, kind: input, shape index: {}]
  %s1 = inlined_call_operand.hbm [shape: f32[8,32], index: 1, kind: input, shape index: {}]
  %s2 = inlined_call_operand.hbm [shape: bf16[16,32], index: 2, kind: input, shape index: {}]
  %s3 = inlined_call_operand.vmem [shape: bf16[32,32], index: 3, kind: input, shape index: {}]
  %s4 = inlined_call_operand.vmem [shape: bf16[32,4], index: 4, kind: input, shape index: {}]
  %s5 = inlined_call_operand.vmem [shape: f32[16,4], index: 5, kind: output, shape index: {}]
  %s6 = sld [smem:[#allocation0]]
  $region42: #{tpu_custom_call.1} parent=0
    _
  %s8 = ssub.s32 1, %s6
  %s9 = scalar_select 0, %s8, %s6
  $region1: #{tpu_custom_call.1} parent=0
    #allocation2 [shape = 'u8[4096]{0}', space=vmem, size = 0x1000, scoped, tag = 'input window, operand 0, single buffered']
    #allocation3 [shape = 's32[1]{0}', space=sflag, size = 0x4, scoped, tag = 'scoped memory for tpu_custom_call.1']
    #allocation4 [shape = 'u8[4096]{0}', space=vmem, size = 0x1000, scoped, tag = 'input window, operand 1, single buffered']
    #allocation5 [shape = 's32[1]{0}', space=sflag, size = 0x4, scoped, tag = 'scoped memory for tpu_custom_call.1']
    #allocation6 [shape = 'u8[4096]{0}', space=vmem, size = 0x1000, scoped, tag = 'input window, operand 2, single buffered']
    %10 = vsyncpa [#allocation3], 0
    %11 = vsyncpa [#allocation5], 0
    // Predicated region
    $region2: #{tpu_custom_call.1} parent=1 // pred_check
      _
    $region3: #{tpu_custom_call.1} parent=1 // pred_check_branch
      %13 = sbr.rel (0) target = $region5
    $region4: #{tpu_custom_call.1} parent=1 // pred_region
      %15 = vsyncadd [#allocation3], 0
      %s16 = sshll.u32 %s0, 4
      %s17 = int_to_ptr.hbm [resolvable:$true] %s16
      %s18 = sshll.u32 [#allocation2], 4
      %s19 = int_to_ptr.vmem [resolvable:$true] %s18
      %24 = dma.hbm_to_vmem [thread:$0]  %s17, 128, %s19, [#allocation3], 64, 64, 4
    $region5: #{tpu_custom_call.1} parent=1 // pred_fallthru
      _
    // Predicated region
    $region6: #{tpu_custom_call.1} parent=1 // pred_check
      _
    $region7: #{tpu_custom_call.1} parent=1 // pred_check_branch
      %26 = sbr.rel (0) target = $region9
    $region8: #{tpu_custom_call.1} parent=1 // pred_region
      %28 = vsyncadd [#allocation5], 0
      %s30 = sshll.u32 %s1, 4
      %s31 = int_to_ptr.hbm [resolvable:$true] %s30
      %s32 = sshll.u32 [#allocation4], 4
      %s33 = int_to_ptr.vmem [resolvable:$true] %s32
      %35 = dma.hbm_to_vmem [thread:$0]  %s31, 128, %s33, [#allocation5]
    $region9: #{tpu_custom_call.1} parent=1 // pred_fallthru
      _
    // Predicated region
    $region10: #{tpu_custom_call.1} parent=1 // pred_check
      _
    $region11: #{tpu_custom_call.1} parent=1 // pred_check_branch
      %37 = sbr.rel (0) target = $region13
    $region12: #{tpu_custom_call.1} parent=1 // pred_region
      %39 = vsyncadd [#allocation5], 0
      %s40 = sshll.u32 %s2, 4
      %s41 = int_to_ptr.hbm [resolvable:$true] %s40
      %s42 = sshll.u32 [#allocation6], 4
      %s43 = int_to_ptr.vmem [resolvable:$true] %s42
      %48 = dma.hbm_to_vmem [thread:$0]  %s41, 128, %s43, [#allocation5], 64, 64, 4
    $region13: #{tpu_custom_call.1} parent=1 // pred_fallthru
      _
    // Predicated region
    $region14: #{tpu_custom_call.1} parent=1 // pred_check
      _
    $region15: #{tpu_custom_call.1} parent=1 // pred_check_branch
      %50 = sbr.rel (0) target = $region17
    $region16: #{tpu_custom_call.1} parent=1 // pred_region
      _
    $region17: #{tpu_custom_call.1} parent=1 // pred_fallthru
      _
    // Predicated region
    $region18: #{tpu_custom_call.1} parent=1 // pred_check
      _
    $region19: #{tpu_custom_call.1} parent=1 // pred_check_branch
      %52 = sbr.rel (0) target = $region21
    $region20: #{tpu_custom_call.1} parent=1 // pred_region
      _
    $region21: #{tpu_custom_call.1} parent=1 // pred_fallthru
      _
    // Predicated region
    $region22: #{tpu_custom_call.1} parent=1 // pred_check
      _
    $region23: #{tpu_custom_call.1} parent=1 // pred_check_branch
      %54 = sbr.rel (0) target = $region25
    $region24: #{tpu_custom_call.1} parent=1 // pred_region
      %56 = dma.done [#allocation3], 128
    $region25: #{tpu_custom_call.1} parent=1 // pred_fallthru
      _
    // Predicated region
    $region26: #{tpu_custom_call.1} parent=1 // pred_check
      _
    $region27: #{tpu_custom_call.1} parent=1 // pred_check_branch
      %58 = sbr.rel (0) target = $region29
    $region28: #{tpu_custom_call.1} parent=1 // pred_region
      %60 = dma.done [#allocation5], 128
    $region29: #{tpu_custom_call.1} parent=1 // pred_fallthru
      _
    // Predicated region
    $region30: #{tpu_custom_call.1} parent=1 // pred_check
      _
    $region31: #{tpu_custom_call.1} parent=1 // pred_check_branch
      %62 = sbr.rel (0) target = $region33
    $region32: #{tpu_custom_call.1} parent=1 // pred_region
      %64 = dma.done [#allocation5], 128
    $region33: #{tpu_custom_call.1} parent=1 // pred_fallthru
      _
    %v66 = vld [vmem:[#allocation2] sm:$0xf]
    %v67 = vld [vmem:[#allocation2 + $0x4] sm:$0xf]
    %v68 = vld [vmem:[#allocation6] sm:$0xf]
    %v69 = vld [vmem:[#allocation6 + $0x4] sm:$0xf]
    %v70 = vld [vmem:[#allocation4] sm:$0x1]
    %v71 = vld [vmem:[#allocation4 + $0x1] sm:$0x1]
    %v72 = vld [vmem:[#allocation4 + $0x2] sm:$0x1]
    %v73 = vperm.slane %v70, 0
    %v76 = vunpack.c.l.b16 %v66
    %v77 = vunpack.c.l.b16 %v67
    %v78 = vpack.c.b16 %v77, %v76
    %v81 = vunpack.c.l.b16 %v68
    %v82 = vunpack.c.l.b16 %v69
    %v83 = vpack.c.b16 %v82, %v81
    %vm85 = vcmask 130048
    %v87 = vsel %vm85, %v78, 0
    %89 = vmatpush.bf16.msra.mxu0 0
    %90 = vmatpush.bf16.msra.mxu0 0
    %91 = vmatpush.bf16.msra.mxu0 0
    %92 = vmatpush.bf16.msra.mxu0 0
    %93 = vmatpush.bf16.msra.mxu0 0
    %94 = vmatpush.bf16.msra.mxu0 0
    %95 = vmatpush.bf16.msra.mxu0 0
    %96 = vmatpush.bf16.msra.mxu0 %v83
    %97 = vmatmul.bf16.gmra.mxu0 %v87
    %v98 = vpop.f32.mrf.mxu0
    %v99 = vadd.f32 %v73, %v98
    %v100 = vpop.f32.mrf.mxu0
    %v101 = vadd.f32 %v73, %v100
    %102 = vdwg.mxu0
    %vm103 = vcmask 261120
    %v104 = vsel %vm103, %v99, 0.0
    %105 = vadd.xlane.f32.xlu0 %v104
    %v106 = vpop.xlane.xlu0 %105
    %v107 = vsel %vm103, %v101, 0.0
    %108 = vadd.xlane.f32.xlu0 %v107
    %v109 = vpop.xlane.xlu0 %108
    %v110 = vrcp.pop 32.0
    %v111 = vmul.f32 32.0, %v110
    %v112 = vsub.f32 1.0, %v111
    %v113 = vmul.f32 %v110, %v112
    %v114 = vadd.f32 %v110, %v113
    %vm115 = vweird.f32 %v110
    %v116 = vsel %vm115, %v110, %v114
    %v117 = vmul.f32 %v106, %v116
    %v118 = vmul.f32 %v109, %v116
    %v119 = vmul.f32 %v99, %v99
    %v120 = vmul.f32 %v101, %v101
    %v121 = vsel %vm103, %v119, 0.0
    %122 = vadd.xlane.f32.xlu0 %v121
    %v123 = vpop.xlane.xlu0 %122
    %v124 = vsel %vm103, %v120, 0.0
    %125 = vadd.xlane.f32.xlu0 %v124
    %v126 = vpop.xlane.xlu0 %125
    %v127 = vmul.f32 %v123, %v116
    %v128 = vmul.f32 %v126, %v116
    %v129 = vmul.f32 %v117, %v117
    %v130 = vmul.f32 %v118, %v118
    %v131 = vsub.f32 %v127, %v129
    %v132 = vsub.f32 %v128, %v130
    %v133 = vsub.f32 %v99, %v117
    %v134 = vsub.f32 %v101, %v118
    %v135 = vadd.f32 %v131, 1e-05
    %v136 = vadd.f32 %v132, 1e-05
    %v137 = vrsqrt.pop %v135
    %v138 = vmul.f32 %v137, %v135
    %v139 = vmul.f32 %v138, %v137
    %v140 = vmul.f32 0.5, %v139
    %v141 = vsub.f32 1.5, %v140
    %v142 = vmul.f32 %v137, %v141
    %vm143 = vweird.f32 %v135
    %vm144 = vweird.f32 %v137
    %vm145 = vmor %vm143, %vm144
    %v146 = vsel %vm145, %v137, %v142
    %v147 = vrsqrt.pop %v136
    %v148 = vmul.f32 %v147, %v136
    %v149 = vmul.f32 %v148, %v147
    %v150 = vmul.f32 0.5, %v149
    %v151 = vsub.f32 1.5, %v150
    %v152 = vmul.f32 %v147, %v151
    %vm153 = vweird.f32 %v136
    %vm154 = vweird.f32 %v147
    %vm155 = vmor %vm153, %vm154
    %v156 = vsel %vm155, %v147, %v152
    %v157 = vperm.slane %v71, 0
    %v158 = vmul.f32 %v146, %v157
    %v159 = vmul.f32 %v156, %v157
    %v160 = vmul.f32 %v133, %v158
    %v161 = vmul.f32 %v134, %v159
    %v162 = vperm.slane %v72, 0
    %v163 = vadd.f32 %v160, %v162
    %v164 = vadd.f32 %v161, %v162
    %v165 = vmax.f32 %v163, 0.0
    %v166 = vmax.f32 %v164, 0.0
    %v167 = vpack.c.bf16 %v166, %v165
    %v168 = vld [vmem:[%s3] sm:$0xf]
    %v169 = vld [vmem:[%s3 + $0x4] sm:$0xf]
    %v170 = vld [vmem:[%s3 + $0x8] sm:$0xf]
    %v171 = vld [vmem:[%s3 + $0xc] sm:$0xf]
    %v172 = vld [vmem:[#allocation4 + $0x3] sm:$0x1]
    %v173 = vld [vmem:[#allocation4 + $0x4] sm:$0x1]
    %v174 = vld [vmem:[#allocation4 + $0x5] sm:$0x1]
    %v175 = vperm.slane %v172, 0
    %v180 = vunpack.c.l.b16 %v168
    %v181 = vunpack.c.l.b16 %v169
    %v182 = vunpack.c.l.b16 %v170
    %v183 = vunpack.c.l.b16 %v171
    %v184 = vpack.c.b16 %v181, %v180
    %v185 = vpack.c.b16 %v183, %v182
    %v189 = vsel %vm103, %v167, 0
    %191 = vmatpush.bf16.msra.mxu0 0
    %192 = vmatpush.bf16.msra.mxu0 0
    %193 = vmatpush.bf16.msra.mxu0 0
    %194 = vmatpush.bf16.msra.mxu0 0
    %195 = vmatpush.bf16.msra.mxu0 0
    %196 = vmatpush.bf16.msra.mxu0 0
    %197 = vmatpush.bf16.msra.mxu0 %v185
    %198 = vmatpush.bf16.msra.mxu0 %v184
    %199 = vmatmul.bf16.gmra.mxu0 %v189
    %v200 = vpop.f32.mrf.mxu0
    %v201 = vadd.f32 %v175, %v200
    %v202 = vpop.f32.mrf.mxu0
    %v203 = vadd.f32 %v175, %v202
    %204 = vdwg.mxu0
    %v205 = vsel %vm103, %v201, 0.0
    %206 = vadd.xlane.f32.xlu0 %v205
    %v207 = vpop.xlane.xlu0 %206
    %v208 = vsel %vm103, %v203, 0.0
    %209 = vadd.xlane.f32.xlu0 %v208
    %v210 = vpop.xlane.xlu0 %209
    %v211 = vmul.f32 %v207, %v116
    %v212 = vmul.f32 %v210, %v116
    %v213 = vmul.f32 %v201, %v201
    %v214 = vmul.f32 %v203, %v203
    %v215 = vsel %vm103, %v213, 0.0
    %216 = vadd.xlane.f32.xlu0 %v215
    %v217 = vpop.xlane.xlu0 %216
    %v218 = vsel %vm103, %v214, 0.0
    %219 = vadd.xlane.f32.xlu0 %v218
    %v220 = vpop.xlane.xlu0 %219
    %v221 = vmul.f32 %v217, %v116
    %v222 = vmul.f32 %v220, %v116
    %v223 = vmul.f32 %v211, %v211
    %v224 = vmul.f32 %v212, %v212
    %v225 = vsub.f32 %v221, %v223
    %v226 = vsub.f32 %v222, %v224
    %v227 = vsub.f32 %v201, %v211
    %v228 = vsub.f32 %v203, %v212
    %v229 = vadd.f32 %v225, 1e-05
    %v230 = vadd.f32 %v226, 1e-05
    %v231 = vrsqrt.pop %v229
    %v232 = vmul.f32 %v231, %v229
    %v233 = vmul.f32 %v232, %v231
    %v234 = vmul.f32 0.5, %v233
    %v235 = vsub.f32 1.5, %v234
    %v236 = vmul.f32 %v231, %v235
    %vm237 = vweird.f32 %v229
    %vm238 = vweird.f32 %v231
    %vm239 = vmor %vm237, %vm238
    %v240 = vsel %vm239, %v231, %v236
    %v241 = vrsqrt.pop %v230
    %v242 = vmul.f32 %v241, %v230
    %v243 = vmul.f32 %v242, %v241
    %v244 = vmul.f32 0.5, %v243
    %v245 = vsub.f32 1.5, %v244
    %v246 = vmul.f32 %v241, %v245
    %vm247 = vweird.f32 %v230
    %vm248 = vweird.f32 %v241
    %vm249 = vmor %vm247, %vm248
    %v250 = vsel %vm249, %v241, %v246
    %v251 = vperm.slane %v173, 0
    %v252 = vmul.f32 %v240, %v251
    %v253 = vmul.f32 %v250, %v251
    %v254 = vmul.f32 %v227, %v252
    %v255 = vmul.f32 %v228, %v253
    %v256 = vperm.slane %v174, 0
    %v257 = vadd.f32 %v254, %v256
    %v258 = vadd.f32 %v255, %v256
    %v259 = vmax.f32 %v257, 0.0
    %v260 = vmax.f32 %v258, 0.0
    %v261 = vpack.c.bf16 %v260, %v259
    %v262 = vld [vmem:[%s4] sm:$0xf]
    %v263 = vld [vmem:[%s4 + $0x4] sm:$0xf]
    %v264 = vld [vmem:[%s4 + $0x8] sm:$0xf]
    %v265 = vld [vmem:[%s4 + $0xc] sm:$0xf]
    %v266 = vld [vmem:[#allocation4 + $0x6] sm:$0x1]
    %v267 = vperm.slane %v266, 0
    %v272 = vunpack.c.l.b16 %v262
    %v273 = vunpack.c.l.b16 %v263
    %v274 = vunpack.c.l.b16 %v264
    %v275 = vunpack.c.l.b16 %v265
    %v276 = vpack.c.b16 %v273, %v272
    %v277 = vpack.c.b16 %v275, %v274
    %v281 = vsel %vm103, %v261, 0
    %283 = vmatpush.bf16.msra.mxu0 0
    %284 = vmatpush.bf16.msra.mxu0 0
    %285 = vmatpush.bf16.msra.mxu0 0
    %286 = vmatpush.bf16.msra.mxu0 0
    %287 = vmatpush.bf16.msra.mxu0 0
    %288 = vmatpush.bf16.msra.mxu0 0
    %289 = vmatpush.bf16.msra.mxu0 %v277
    %290 = vmatpush.bf16.msra.mxu0 %v276
    %291 = vmatmul.bf16.gmra.mxu0 %v281
    %v292 = vpop.f32.mrf.mxu0
    %v293 = vadd.f32 %v267, %v292
    %v294 = vpop.f32.mrf.mxu0
    %v295 = vadd.f32 %v267, %v294
    %296 = vdwg.mxu0
    %v297 = vtanh.pop %v293
    %v298 = vtanh.pop %v295
    %vm299 = vcmask 31744
    %300 = vst.msk [vmem:[%s5] sm:$0xff] %vm299, %v297
    %301 = vst.msk [vmem:[%s5 + $0x8] sm:$0xff] %vm299, %v298
    // Predicated region
    $region34: #{tpu_custom_call.1} parent=1 // pred_check
      _
    $region35: #{tpu_custom_call.1} parent=1 // pred_check_branch
      %303 = sbr.rel (0) target = $region37
    $region36: #{tpu_custom_call.1} parent=1 // pred_region
      _
    $region37: #{tpu_custom_call.1} parent=1 // pred_fallthru
      _
    // Predicated region
    $region38: #{tpu_custom_call.1} parent=1 // pred_check
      _
    $region39: #{tpu_custom_call.1} parent=1 // pred_check_branch
      %305 = sbr.rel (0) target = $region41
    $region40: #{tpu_custom_call.1} parent=1 // pred_region
      _
    $region41: #{tpu_custom_call.1} parent=1 // pred_fallthru
      _
    %306 = vsyncpa [#allocation3], 1
    %307 = vsyncpa [#allocation5], 1

</llo_original>
